<compile_context>
chip_gen: v5e
topology: v5e:2x2
jax: 0.10.0
libtpu: 0.0.40
codegen_flags: <defaults>
</compile_context>

<pallas_src>
import functools

import jax
import jax.numpy as jnp
from jax.experimental import pallas as pl
from jax.experimental.pallas import tpu as pltpu

MARGIN = 2.0
CONTRASTIVE_THRES = 0.9
PAIRWISE_EPS = 1e-6  # matches torch.nn.functional.pairwise_distance default

_PARTIAL_ROWS = 8     # sublane-aligned partials tile
_PARTIAL_LANES = 128  # lane-dense partials tile (avoids masked partial stores)


def _contrastive_kernel(o1_ref, o2_ref, lbl_ref, part_ref, *, batch_size, block_rows):
    pid = pl.program_id(0)

    # Upcast on the VMEM tile (inputs may arrive bf16; keeps HBM traffic minimal
    # and keeps the whole elementwise chain in f32 on v5e).
    o1 = o1_ref[...].astype(jnp.float32)                      # (TB, D)
    o2 = o2_ref[...].astype(jnp.float32)                      # (TB, D)
    label = lbl_ref[...].astype(jnp.float32)                  # (TB, 1)

    diff = o1 - o2 + PAIRWISE_EPS
    dist_sq = jnp.sum(diff * diff, axis=-1, keepdims=True)    # (TB, 1)
    dist = jnp.sqrt(dist_sq)                                  # (TB, 1)

    # (1 - y) * d^2 / 2 + y * clamp(margin - d, 0)^2
    hinge = jnp.maximum(MARGIN - dist, 0.0)
    per_pair = (1.0 - label) * dist_sq * 0.5 + label * hinge * hinge

    # Bit-exact with the reference: predicate on dist (sqrt already computed).
    pred = (dist > CONTRASTIVE_THRES).astype(jnp.float32)
    match = (pred == label).astype(jnp.float32)               # exact 0/1 equality, as torch

    # Mask rows of the (possibly padded) tail block; where-select so garbage
    # (inf/NaN) in padded rows never contaminates the sums.
    row_ids = pid * block_rows + jax.lax.broadcasted_iota(
        jnp.int32, (block_rows, 1), 0)
    valid = row_ids < batch_size
    loss_sum = jnp.sum(jnp.where(valid, per_pair, 0.0))
    match_sum = jnp.sum(jnp.where(valid, match, 0.0))

    # Lane-dense per-block partials: row 0 lane 0 = loss-sum, lane 1 = correct-count.
    rows = jax.lax.broadcasted_iota(jnp.int32, (_PARTIAL_ROWS, _PARTIAL_LANES), 0)
    lanes = jax.lax.broadcasted_iota(jnp.int32, (_PARTIAL_ROWS, _PARTIAL_LANES), 1)
    vals = jnp.where(lanes == 0, loss_sum, jnp.where(lanes == 1, match_sum, 0.0))
    part_ref[...] = jnp.where(rows == 0, vals, 0.0)


def _cdiv(a, b):
    return -(-a // b)


def _round_up(x, m):
    return _cdiv(x, m) * m


def _vmem_plan():
    """(double-buffer pipeline budget bytes, scoped vmem limit bytes) per generation."""
    try:
        cap = int(pltpu.get_tpu_info().vmem_capacity_bytes)
    except Exception:
        cap = 64 * 1024 * 1024                      # conservative: assume v7x-sized VMEM
    if cap >= 128 * 1024 * 1024:                    # v5e / v6e: 128 MiB physical
        return 48 * 1024 * 1024, 96 * 1024 * 1024
    # v7x: 64 MiB physical per TC -> smaller pipeline budget + explicit headroom
    # for in-kernel f32 upcast temporaries and compiler internal scratch.
    return 20 * 1024 * 1024, 48 * 1024 * 1024


def _choose_block_rows(batch, dim, in_dtype, lbl_dtype, vmem_budget_bytes):
    in_item = jnp.dtype(in_dtype).itemsize
    lbl_item = jnp.dtype(lbl_dtype).itemsize

    # Sublane alignment follows the input dtype packing (f32->8, bf16->16, i8/fp8->32).
    align = 8 * max(1, 4 // max(1, in_item))

    # VMEM-accurate per-row cost of the double-buffered BlockSpec pipeline:
    #   2 buffers * (2 lane-padded feature tiles + lane-padded label tile).
    lane_d = _round_up(dim, 128)
    bytes_per_row = 2 * (2 * lane_d * in_item + _PARTIAL_LANES * lbl_item)

    tb = max(align, (vmem_budget_bytes // bytes_per_row) // align * align)
    padded_batch = _round_up(batch, align)
    tb = min(tb, padded_batch)                      # never bigger than the (padded) batch

    # Megacore: keep >= 2 grid steps (v7x has 2 TensorCores) whenever splittable.
    if padded_batch > align:
        tb = min(tb, _round_up(_cdiv(padded_batch, 2), align))

    # Prefer an even block count so the two cores stay balanced (best effort).
    n = _cdiv(padded_batch, tb)
    if n > 1 and n % 2 == 1:
        tb2 = _round_up(_cdiv(padded_batch, n + 1), align)
        if tb2 >= align and _cdiv(padded_batch, tb2) % 2 == 0:
            tb = tb2
    return tb


def contrastive_loss(output1, output2, label, *, block_rows=None):
    """output1/output2: (B, D); label: (B, 1) in {0,1}. Returns (loss, acc) f32 scalars."""
    batch, dim = output1.shape
    assert output2.shape == (batch, dim)
    assert label.shape == (batch, 1)

    budget, vmem_limit = _vmem_plan()
    if block_rows is None:
        block_rows = _choose_block_rows(batch, dim, output1.dtype, label.dtype, budget)
    tb = block_rows
    num_blocks = _cdiv(batch, tb)

    in_item = jnp.dtype(output1.dtype).itemsize
    lbl_item = jnp.dtype(label.dtype).itemsize
    cost = pl.CostEstimate(
        flops=4 * batch * dim + 16 * batch,
        transcendentals=batch,                      # one sqrt per row
        bytes_accessed=(2 * batch * dim * in_item
                        + batch * lbl_item
                        + num_blocks * _PARTIAL_ROWS * _PARTIAL_LANES * 4),
    )

    kernel = functools.partial(
        _contrastive_kernel, batch_size=batch, block_rows=tb)

    partials = pl.pallas_call(
        kernel,
        out_shape=jax.ShapeDtypeStruct(
            (num_blocks * _PARTIAL_ROWS, _PARTIAL_LANES), jnp.float32),
        grid=(num_blocks,),
        in_specs=[
            pl.BlockSpec((tb, dim), lambda i: (i, 0)),
            pl.BlockSpec((tb, dim), lambda i: (i, 0)),
            # TODO(synk): for D<=128 the lane-padded (tb,128) label tile is ~1/3 of the
            # per-block VMEM; could be shrunk (narrow label dtype / SMEM path) if labels
            # are guaranteed exactly {0,1}.  Kept as-is to preserve the torch float-==.
            pl.BlockSpec((tb, 1), lambda i: (i, 0)),
        ],
        out_specs=pl.BlockSpec(
            (_PARTIAL_ROWS, _PARTIAL_LANES), lambda i: (i, 0)),
        compiler_params=pltpu.CompilerParams(
            dimension_semantics=("parallel",),   # independent per-block partials (2 TCs on v7x)
            vmem_limit_bytes=vmem_limit,         # generation-switched scoped limit
        ),
        cost_estimate=cost,
    )(output1, output2, label)

    # Tiny final reduction in the wrapper: only rows 0 mod 8 / lanes {0,1} are non-zero.
    inv_b = 1.0 / batch
    loss = jnp.sum(partials[:, 0]) * (0.5 * inv_b)
    acc = jnp.sum(partials[:, 1]) * inv_b
    return loss, acc


def _reference(output1, output2, label):
    # Pure-JAX reference mirroring the PyTorch math.
    o1 = output1.astype(jnp.float32)
    o2 = output2.astype(jnp.float32)
    lbl = label.astype(jnp.float32)
    diff = o1 - o2 + PAIRWISE_EPS
    dist = jnp.sqrt(jnp.sum(diff * diff, axis=-1, keepdims=True))
    loss = jnp.mean(
        (1.0 - lbl) * dist**2 / 2.0
        + lbl * jnp.maximum(MARGIN - dist, 0.0) ** 2
    ) / 2.0
    acc = jnp.mean(
        ((dist > CONTRASTIVE_THRES).astype(jnp.float32) == lbl).astype(jnp.float32))
    return loss, acc


if __name__ == "__main__":
    key = jax.random.PRNGKey(0)
    k1, k2, k3 = jax.random.split(key, 3)

    B, D = 8, 32
    output1 = jax.random.normal(k1, (B, D), dtype=jnp.float32)
    output2 = jax.random.normal(k2, (B, D), dtype=jnp.float32)
    label = jax.random.bernoulli(k3, 0.5, (B, 1)).astype(jnp.float32)

    loss, acc = contrastive_loss(output1, output2, label)
    jax.block_until_ready((loss, acc))

    ref_loss, ref_acc = _reference(output1, output2, label)
    assert jnp.allclose(loss, ref_loss, atol=1e-5), (loss, ref_loss)
    assert jnp.allclose(acc, ref_acc, atol=1e-6), (acc, ref_acc)

    print("KERNEL_OK")
</pallas_src>

<mosaic_0001>
module attributes {stable_mosaic.version = 11 : i64} {
  func.func @_contrastive_kernel(%arg0: i32, %arg1: memref<8x32xf32, #tpu.memory_space<vmem>>, %arg2: memref<8x32xf32, #tpu.memory_space<vmem>>, %arg3: memref<8x1xf32, #tpu.memory_space<vmem>>, %arg4: memref<8x128xf32, #tpu.memory_space<vmem>>) attributes {dimension_semantics = [#tpu.dimension_semantics<parallel>], iteration_bounds = array<i64: 1>, scalar_prefetch = 0 : i64, scratch_operands = 0 : i64, tpu.core_type = #tpu.core_type<tc>, window_params = [{transform_indices = @transform_0, window_bounds = array<i64: 8, 32>}, {transform_indices = @transform_1, window_bounds = array<i64: 8, 32>}, {transform_indices = @transform_2, window_bounds = array<i64: 8, 1>}, {transform_indices = @transform_3, window_bounds = array<i64: 8, 128>}]} {
    %c0 = arith.constant 0 : index
    %c0_0 = arith.constant 0 : index
    %0 = vector.load %arg1[%c0, %c0_0] : memref<8x32xf32, #tpu.memory_space<vmem>>, vector<8x32xf32>
    %c0_1 = arith.constant 0 : index
    %c0_2 = arith.constant 0 : index
    %1 = vector.load %arg2[%c0_1, %c0_2] : memref<8x32xf32, #tpu.memory_space<vmem>>, vector<8x32xf32>
    %c0_3 = arith.constant 0 : index
    %c0_4 = arith.constant 0 : index
    %2 = vector.load %arg3[%c0_3, %c0_4] : memref<8x1xf32, #tpu.memory_space<vmem>>, vector<8x1xf32>
    %3 = arith.subf %0, %1 : vector<8x32xf32>
    %cst = arith.constant 9.99999997E-7 : f32
    %4 = vector.broadcast %cst : f32 to vector<8x32xf32>
    %5 = arith.addf %3, %4 : vector<8x32xf32>
    %6 = arith.mulf %5, %5 : vector<8x32xf32>
    %cst_5 = arith.constant dense<0.000000e+00> : vector<8xf32>
    %7 = vector.multi_reduction <add>, %6, %cst_5 [1] : vector<8x32xf32> to vector<8xf32>
    %8 = vector.shape_cast %7 : vector<8xf32> to vector<8x1xf32>
    %9 = math.sqrt %8 : vector<8x1xf32>
    %cst_6 = arith.constant 2.000000e+00 : f32
    %10 = vector.broadcast %cst_6 : f32 to vector<8x1xf32>
    %11 = arith.subf %10, %9 : vector<8x1xf32>
    %cst_7 = arith.constant 0.000000e+00 : f32
    %12 = vector.broadcast %cst_7 : f32 to vector<8x1xf32>
    %13 = arith.maximumf %11, %12 : vector<8x1xf32>
    %cst_8 = arith.constant 1.000000e+00 : f32
    %14 = vector.broadcast %cst_8 : f32 to vector<8x1xf32>
    %15 = arith.subf %14, %2 : vector<8x1xf32>
    %16 = arith.mulf %15, %8 : vector<8x1xf32>
    %cst_9 = arith.constant 5.000000e-01 : f32
    %17 = vector.broadcast %cst_9 : f32 to vector<8x1xf32>
    %18 = arith.mulf %16, %17 : vector<8x1xf32>
    %19 = arith.mulf %2, %13 : vector<8x1xf32>
    %20 = arith.mulf %19, %13 : vector<8x1xf32>
    %21 = arith.addf %18, %20 : vector<8x1xf32>
    %cst_10 = arith.constant 0.899999976 : f32
    %22 = vector.broadcast %cst_10 : f32 to vector<8x1xf32>
    %23 = arith.cmpf ogt, %9, %22 : vector<8x1xf32>
    %24 = arith.extui %23 : vector<8x1xi1> to vector<8x1xi32>
    %25 = arith.sitofp %24 : vector<8x1xi32> to vector<8x1xf32>
    %26 = arith.cmpf oeq, %25, %2 : vector<8x1xf32>
    %27 = arith.extui %26 : vector<8x1xi1> to vector<8x1xi32>
    %28 = arith.sitofp %27 : vector<8x1xi32> to vector<8x1xf32>
    %c8_i32 = arith.constant 8 : i32
    %29 = arith.muli %arg0, %c8_i32 : i32
    %30 = tpu.iota {dimensions = array<i32: 0>} : vector<8x1xi32>
    %31 = vector.broadcast %29 : i32 to vector<8x1xi32>
    %32 = arith.addi %31, %30 : vector<8x1xi32>
    %c8_i32_11 = arith.constant 8 : i32
    %33 = vector.broadcast %c8_i32_11 : i32 to vector<8x1xi32>
    %34 = arith.cmpi slt, %32, %33 : vector<8x1xi32>
    %cst_12 = arith.constant 0.000000e+00 : f32
    %35 = vector.broadcast %cst_12 : f32 to vector<8x1xf32>
    %36 = arith.select %34, %21, %35 : vector<8x1xi1>, vector<8x1xf32>
    %37 = vector.shape_cast %36 : vector<8x1xf32> to vector<1x8x1xf32>
    %cst_13 = arith.constant dense<0.000000e+00> : vector<1xf32>
    %38 = vector.multi_reduction <add>, %37, %cst_13 [1, 2] : vector<1x8x1xf32> to vector<1xf32>
    %39 = vector.shape_cast %38 : vector<1xf32> to vector<1x1x1xf32>
    %40 = vector.extract %39[0, 0, 0] : f32 from vector<1x1x1xf32>
    %cst_14 = arith.constant 0.000000e+00 : f32
    %41 = vector.broadcast %cst_14 : f32 to vector<8x1xf32>
    %42 = arith.select %34, %28, %41 : vector<8x1xi1>, vector<8x1xf32>
    %43 = vector.shape_cast %42 : vector<8x1xf32> to vector<1x8x1xf32>
    %cst_15 = arith.constant dense<0.000000e+00> : vector<1xf32>
    %44 = vector.multi_reduction <add>, %43, %cst_15 [1, 2] : vector<1x8x1xf32> to vector<1xf32>
    %45 = vector.shape_cast %44 : vector<1xf32> to vector<1x1x1xf32>
    %46 = vector.extract %45[0, 0, 0] : f32 from vector<1x1x1xf32>
    %47 = tpu.iota {dimensions = array<i32: 0>} : vector<8x128xi32>
    %48 = tpu.iota {dimensions = array<i32: 1>} : vector<8x128xi32>
    %c0_i32 = arith.constant 0 : i32
    %49 = vector.broadcast %c0_i32 : i32 to vector<8x128xi32>
    %50 = arith.cmpi eq, %48, %49 : vector<8x128xi32>
    %c1_i32 = arith.constant 1 : i32
    %51 = vector.broadcast %c1_i32 : i32 to vector<8x128xi32>
    %52 = arith.cmpi eq, %48, %51 : vector<8x128xi32>
    %cst_16 = arith.constant 0.000000e+00 : f32
    %53 = vector.broadcast %46 : f32 to vector<8x128xf32>
    %54 = vector.broadcast %cst_16 : f32 to vector<8x128xf32>
    %55 = arith.select %52, %53, %54 : vector<8x128xi1>, vector<8x128xf32>
    %56 = vector.broadcast %40 : f32 to vector<8x128xf32>
    %57 = arith.select %50, %56, %55 : vector<8x128xi1>, vector<8x128xf32>
    %c0_i32_17 = arith.constant 0 : i32
    %58 = vector.broadcast %c0_i32_17 : i32 to vector<8x128xi32>
    %59 = arith.cmpi eq, %47, %58 : vector<8x128xi32>
    %cst_18 = arith.constant 0.000000e+00 : f32
    %60 = vector.broadcast %cst_18 : f32 to vector<8x128xf32>
    %61 = arith.select %59, %57, %60 : vector<8x128xi1>, vector<8x128xf32>
    %c0_19 = arith.constant 0 : index
    %c0_20 = arith.constant 0 : index
    %62 = vector.load %arg4[%c0_19, %c0_20] : memref<8x128xf32, #tpu.memory_space<vmem>>, vector<8x128xf32>
    tpu.vector_store %arg4[%c0_19, %c0_20], %61 {strides = array<i32>} : memref<8x128xf32, #tpu.memory_space<vmem>>, vector<8x128xf32>,
    return
  }
  func.func @transform_0(%arg0: i32) -> (i32, i32) {
    %c0_i32 = arith.constant 0 : i32
    %c0_i32_0 = arith.constant 0 : i32
    return %arg0, %c0_i32 : i32, i32
  }
  func.func @transform_1(%arg0: i32) -> (i32, i32) {
    %c0_i32 = arith.constant 0 : i32
    %c0_i32_0 = arith.constant 0 : i32
    return %arg0, %c0_i32 : i32, i32
  }
  func.func @transform_2(%arg0: i32) -> (i32, i32) {
    %c0_i32 = arith.constant 0 : i32
    %c0_i32_0 = arith.constant 0 : i32
    return %arg0, %c0_i32 : i32, i32
  }
  func.func @transform_3(%arg0: i32) -> (i32, i32) {
    %c0_i32 = arith.constant 0 : i32
    %c0_i32_0 = arith.constant 0 : i32
    return %arg0, %c0_i32 : i32, i32
  }
}

</mosaic_0001>

<llo_original>
// kernel: tpu_custom_call.1
$region0: #{tpu_custom_call.1}
  #allocation0 [shape = 'u32[]', space=smem, size = 0x4, offset = 0x4, fixed_abs, tag = 'smem constant byte address 0x4 - core index']
  #allocation1 [shape = 'u32[72,128]{1,0:T(1,128)}', space=vmem, size = 0x9000, scoped, tag = 'internal scratch']
  %s0 = inlined_call_operand.vmem [shape: f32[8,32], index: 0, kind: input, shape index: {}]
  %s1 = inlined_call_operand.hbm [shape: f32[8,32], index: 1, kind: input, shape index: {}]
  %s2 = inlined_call_operand.vmem [shape: f32[8,1], index: 2, kind: input, shape index: {}]
  %s3 = inlined_call_operand.hbm [shape: f32[8,128], index: 3, kind: output, shape index: {}]
  %s4 = sld [smem:[#allocation0]]
  $region26: #{tpu_custom_call.1} parent=0
    _
  %s6 = ssub.s32 1, %s4
  %s7 = scalar_select 0, %s6, %s4
  $region1: #{tpu_custom_call.1} parent=0
    #allocation2 [shape = 'u8[4096]{0}', space=vmem, size = 0x1000, scoped, tag = 'input window, operand 1, single buffered']
    #allocation3 [shape = 's32[1]{0}', space=sflag, size = 0x4, scoped, tag = 'scoped memory for tpu_custom_call.1']
    #allocation4 [shape = 's32[1]{0}', space=sflag, size = 0x4, scoped, tag = 'scoped memory for tpu_custom_call.1']
    #allocation5 [shape = 'u8[4096]{0}', space=vmem, size = 0x1000, scoped, tag = 'output window, operand 0, single buffered']
    %8 = vsyncpa [#allocation3], 0
    %9 = vsyncpa [#allocation4], 0
    // Predicated region
    $region2: #{tpu_custom_call.1} parent=1 // pred_check
      _
    $region3: #{tpu_custom_call.1} parent=1 // pred_check_branch
      %11 = sbr.rel (0) target = $region5
    $region4: #{tpu_custom_call.1} parent=1 // pred_region
      _
    $region5: #{tpu_custom_call.1} parent=1 // pred_fallthru
      _
    // Predicated region
    $region6: #{tpu_custom_call.1} parent=1 // pred_check
      _
    $region7: #{tpu_custom_call.1} parent=1 // pred_check_branch
      %13 = sbr.rel (0) target = $region9
    $region8: #{tpu_custom_call.1} parent=1 // pred_region
      %15 = vsyncadd [#allocation3], 0
      %s17 = sshll.u32 %s1, 4
      %s18 = int_to_ptr.hbm [resolvable:$true] %s17
      %s19 = sshll.u32 [#allocation2], 4
      %s20 = int_to_ptr.vmem [resolvable:$true] %s19
      %22 = dma.hbm_to_vmem [thread:$0]  %s18, 128, %s20, [#allocation3]
    $region9: #{tpu_custom_call.1} parent=1 // pred_fallthru
      _
    // Predicated region
    $region10: #{tpu_custom_call.1} parent=1 // pred_check
      _
    $region11: #{tpu_custom_call.1} parent=1 // pred_check_branch
      %24 = sbr.rel (0) target = $region13
    $region12: #{tpu_custom_call.1} parent=1 // pred_region
      _
    $region13: #{tpu_custom_call.1} parent=1 // pred_fallthru
      _
    // Predicated region
    $region14: #{tpu_custom_call.1} parent=1 // pred_check
      _
    $region15: #{tpu_custom_call.1} parent=1 // pred_check_branch
      %26 = sbr.rel (0) target = $region17
    $region16: #{tpu_custom_call.1} parent=1 // pred_region
      %28 = dma.done [#allocation3], 128
    $region17: #{tpu_custom_call.1} parent=1 // pred_fallthru
      _
    %v29 = vld [vmem:[%s0] sm:$0xff]
    %v30 = vld [vmem:[#allocation2] sm:$0xff]
    %v31 = vld [vmem:[%s2] sm:$0xff]
    %v32 = vsub.f32 %v29, %v30
    %v33 = vadd.f32 %v32, 1e-06
    %v34 = vmul.f32 %v33, %v33
    %vm35 = vcmask 261120
    %v36 = vsel %vm35, %v34, 0.0
    %37 = vadd.xlane.f32.xlu0 %v36
    %v38 = vpop.xlane.xlu0 %37
    %v39 = vrsqrt.pop %v38
    %v40 = vmul.f32 %v39, %v38
    %v41 = vmul.f32 %v40, %v39
    %v42 = vmul.f32 0.5, %v41
    %v43 = vsub.f32 1.5, %v42
    %v44 = vmul.f32 %v39, %v43
    %v45 = vmul.f32 %v38, %v44
    %vm46 = vcmp.eq.f32.partialorder %v38, inf
    %v47 = vsel %vm46, %v38, %v45
    %vm48 = vcmp.eq.f32.partialorder %v38, 0.0
    %v49 = vand.u32 %v38, 2147483648
    %v50 = vsel %vm48, %v49, %v47
    %v51 = vsub.f32 2.0, %v50
    %v52 = vmax.f32 %v51, 0.0
    %v53 = vsub.f32 1.0, %v31
    %v54 = vmul.f32 %v53, %v38
    %v55 = vmul.f32 %v54, 0.5
    %v56 = vmul.f32 %v31, %v52
    %v57 = vmul.f32 %v56, %v52
    %v58 = vadd.f32 %v55, %v57
    %vm59 = vcmp.gt.f32.partialorder %v50, 0.9
    %v60 = vsel %vm59, 1, 0
    %v61 = vcvt.s32.f32 %v60
    %vm62 = vcmp.eq.f32.partialorder %v61, %v31
    %v63 = vsel %vm62, 1, 0
    %v64 = vcvt.s32.f32 %v63
    %s65 = smul.u32 0, 8
    %v66 = vlaneseq
    %v67 = vshrl.u32 %v66, 7
    %v68 = vstv %s65
    %v69 = vadd.s32 %v68, %v67
    %vm70 = vcmp.lt.s32.totalorder %v69, 8
    %v71 = vsel %vm70, %v58, 0.0
    %vm72 = vcmask 7168
    %v73 = vsel %vm72, %v71, 0.0
    %74 = vadd.xlane.f32.xlu0 %v73
    %v75 = vpop.xlane.xlu0 %74
    %v76 = vrot.slane %v75, 4
    %v77 = vadd.f32 %v75, %v76
    %v78 = vrot.slane %v77, 2
    %v79 = vadd.f32 %v77, %v78
    %v80 = vrot.slane %v79, 1
    %v81 = vadd.f32 %v79, %v80
    %s82 = vtos %v81
    %v83 = vsel %vm70, %v64, 0.0
    %v84 = vsel %vm72, %v83, 0.0
    %85 = vadd.xlane.f32.xlu0 %v84
    %v86 = vpop.xlane.xlu0 %85
    %v87 = vrot.slane %v86, 4
    %v88 = vadd.f32 %v86, %v87
    %v89 = vrot.slane %v88, 2
    %v90 = vadd.f32 %v88, %v89
    %v91 = vrot.slane %v90, 1
    %v92 = vadd.f32 %v90, %v91
    %s93 = vtos %v92
    %v94 = vlaneseq
    %v95 = vand.u32 %v94, 127
    %vm96 = vcmp.eq.s32.totalorder %v95, 0
    %vm97 = vcmp.eq.s32.totalorder %v95, 1
    %v98 = vstv %s93
    %v99 = vsel %vm97, %v98, 0.0
    %v100 = vstv %s82
    %v101 = vsel %vm96, %v100, %v99
    %vm102 = vcmp.eq.s32.totalorder %v67, 0
    %v103 = vsel %vm102, %v101, 0.0
    %104 = vst [vmem:[#allocation5] sm:$0xff] %v103
    // Predicated region
    $region18: #{tpu_custom_call.1} parent=1 // pred_check
      _
    $region19: #{tpu_custom_call.1} parent=1 // pred_check_branch
      %106 = sbr.rel (0) target = $region21
    $region20: #{tpu_custom_call.1} parent=1 // pred_region
      %108 = vsyncadd [#allocation4], 0
      %s110 = sshll.u32 [#allocation5], 4
      %s111 = int_to_ptr.vmem [resolvable:$true] %s110
      %s112 = sshll.u32 %s3, 4
      %s113 = int_to_ptr.hbm [resolvable:$true] %s112
      %115 = dma.vmem_to_hbm [thread:$0]  %s111, 128, %s113, [#allocation4]
    $region21: #{tpu_custom_call.1} parent=1 // pred_fallthru
      _
    // Predicated region
    $region22: #{tpu_custom_call.1} parent=1 // pred_check
      _
    $region23: #{tpu_custom_call.1} parent=1 // pred_check_branch
      %117 = sbr.rel (0) target = $region25
    $region24: #{tpu_custom_call.1} parent=1 // pred_region
      %119 = dma.done [#allocation4], 128
    $region25: #{tpu_custom_call.1} parent=1 // pred_fallthru
      _
    %120 = vsyncpa [#allocation3], 1
    %121 = vsyncpa [#allocation4], 1

</llo_original>
